<compile_context>
chip_gen: v5e
topology: v5e:2x2
jax: 0.10.0
libtpu: 0.0.40
codegen_flags: <defaults>
</compile_context>

<pallas_src>
import math

import jax
import jax.numpy as jnp
from jax.experimental import pallas as pl
from jax.experimental.pallas import tpu as pltpu


def _round_up(x, m):
    return ((x + m - 1) // m) * m


def _choose_tile(B, tb_max=512):
    """Balanced batch tile: multiple of 8 sublanes, <= tb_max, minimal tail pad."""
    Bp8 = _round_up(B, 8)
    if Bp8 <= tb_max:
        return Bp8
    n_tiles = -(-B // tb_max)                 # ceil(B / tb_max)  (>= 2)
    return _round_up(-(-B // n_tiles), 8)     # balanced tile size


def _has_bf16_vpu():
    """v6e/v7x have bf16 VPU/EUP; v5e and older do not (fall back to f32 SiLU)."""
    try:
        kind = jax.devices()[0].device_kind.lower()
    except Exception:
        return False
    return not any(old in kind for old in ("v2", "v3", "v4", "v5"))


def make_sigma_block_kernel(bf16_silu):
    def kernel(cond_ref, g_ref, phase_ref, w1_ref, b1_ref, w2_ref, b2_ref, out_ref):
        cond = cond_ref[...]                              # (TB, 1)   f32
        # rescaled = log10(cond); RFF as a single lane-dense sin over 128 lanes.
        rescaled = jnp.log10(cond)                        # (TB, 1)   f32
        emb = jnp.sin(rescaled * g_ref[...] + phase_ref[...])  # (TB, 128) f32

        # proj1: bf16 operands on the MXU, f32 accumulation, f32 bias.
        h = jnp.dot(emb.astype(jnp.bfloat16), w1_ref[...],
                    preferred_element_type=jnp.float32)   # (TB, 512) f32
        h = h + b1_ref[...]

        if bf16_silu:
            # bf16 SiLU (v6e/v7x: bf16 VPU/EUP) — also feeds the 2nd dot directly.
            h = h.astype(jnp.bfloat16)
            h = h * jax.nn.sigmoid(h)
            o = jnp.dot(h, w2_ref[...],
                        preferred_element_type=jnp.float32)
            o = o + b2_ref[...]
            o = o.astype(jnp.bfloat16)
            o = o * jax.nn.sigmoid(o)
        else:
            # f32 SiLU path (v5e: no bf16 VPU/EUP).
            h = h * jax.nn.sigmoid(h)
            o = jnp.dot(h.astype(jnp.bfloat16), w2_ref[...],
                        preferred_element_type=jnp.float32)
            o = o + b2_ref[...]
            o = o * jax.nn.sigmoid(o)

        out_ref[...] = o.astype(out_ref.dtype)

    return kernel


def prepare_sigma_block_params(gaussian, w1, b1, w2, b2):
    """One-time parameter prep (do at init, NOT per call):
       - duplicate the RFF gaussian along lanes, fold in 2*pi, add a pi/2 phase
         vector so cos/sin become one sin over 128 lanes;
       - cast weights to bf16 (f32 MXU accumulation in-kernel);
       - keep biases in f32 (tiny, avoids in-kernel casts / rounding)."""
    g = gaussian.reshape(1, -1).astype(jnp.float32)                    # (1, 64)
    g_cat = (2.0 * math.pi) * jnp.concatenate([g, g], axis=1)          # (1, 128)
    phase = jnp.concatenate(
        [jnp.full((1, g.shape[1]), math.pi / 2.0, jnp.float32),
         jnp.zeros((1, g.shape[1]), jnp.float32)], axis=1)             # (1, 128)
    return dict(
        g_cat=g_cat,                                                   # (1, 128) f32
        phase=phase,                                                   # (1, 128) f32
        w1=w1.astype(jnp.bfloat16),                                    # (128, 512)
        b1=b1.reshape(1, -1).astype(jnp.float32),                      # (1, 512) f32
        w2=w2.astype(jnp.bfloat16),                                    # (512, 512)
        b2=b2.reshape(1, -1).astype(jnp.float32),                      # (1, 512) f32
    )


def sigma_block(cond, params, *, bf16_silu=None, out_dtype=jnp.float32):
    """cond: (B,) positive f32 sigmas (cond <= 0 yields -inf/NaN, same as the
       PyTorch module).  Returns (B, 512) in out_dtype (f32 by default)."""
    if bf16_silu is None:
        bf16_silu = _has_bf16_vpu()

    B = cond.shape[0]
    TB = _choose_tile(B, tb_max=512)
    Bp = _round_up(B, TB)
    # Pad with 1.0 so log10(pad) == 0 (no NaNs in dead rows).
    cond_p = jnp.pad(cond.astype(jnp.float32), (0, Bp - B), constant_values=1.0)
    cond2d = cond_p.reshape(Bp, 1)

    grid = (Bp // TB,)
    out = pl.pallas_call(
        make_sigma_block_kernel(bf16_silu),
        out_shape=jax.ShapeDtypeStruct((Bp, 512), out_dtype),
        grid=grid,
        in_specs=[
            pl.BlockSpec((TB, 1), lambda i: (i, 0)),       # cond  (per batch tile)
            pl.BlockSpec((1, 128), lambda i: (0, 0)),      # g_cat   (resident)
            pl.BlockSpec((1, 128), lambda i: (0, 0)),      # phase   (resident)
            pl.BlockSpec((128, 512), lambda i: (0, 0)),    # w1      (resident)
            pl.BlockSpec((1, 512), lambda i: (0, 0)),      # b1      (resident)
            pl.BlockSpec((512, 512), lambda i: (0, 0)),    # w2      (resident)
            pl.BlockSpec((1, 512), lambda i: (0, 0)),      # b2      (resident)
        ],
        out_specs=pl.BlockSpec((TB, 512), lambda i: (i, 0)),
        compiler_params=pltpu.CompilerParams(
            dimension_semantics=("parallel",)),
    )(cond2d, params["g_cat"], params["phase"], params["w1"], params["b1"],
      params["w2"], params["b2"])
    return out[:B]


def reference_f32(cond, gaussian, w1, b1, w2, b2):
    """Pure-JAX f32 reference mirroring the PyTorch forward exactly."""
    rescaled = jnp.log10(cond)[:, None]                          # (B, 1)
    arg = 2.0 * math.pi * rescaled * gaussian                    # (B, 64)
    emb = jnp.concatenate([jnp.cos(arg), jnp.sin(arg)], axis=1)  # (B, 128)
    h = emb @ w1 + b1
    h = h * jax.nn.sigmoid(h)
    o = h @ w2 + b2
    return o * jax.nn.sigmoid(o)


def reference_matched(cond, params, bf16_silu):
    """Reference with the same bf16 rounding points as the kernel."""
    rescaled = jnp.log10(cond.astype(jnp.float32))[:, None]
    emb = jnp.sin(rescaled * params["g_cat"] + params["phase"])
    h = jnp.dot(emb.astype(jnp.bfloat16), params["w1"],
                preferred_element_type=jnp.float32) + params["b1"]
    if bf16_silu:
        h = h.astype(jnp.bfloat16)
        h = h * jax.nn.sigmoid(h)
        o = jnp.dot(h, params["w2"],
                    preferred_element_type=jnp.float32) + params["b2"]
        o = o.astype(jnp.bfloat16)
        o = o * jax.nn.sigmoid(o)
    else:
        h = h * jax.nn.sigmoid(h)
        o = jnp.dot(h.astype(jnp.bfloat16), params["w2"],
                    preferred_element_type=jnp.float32) + params["b2"]
        o = o * jax.nn.sigmoid(o)
    return o.astype(jnp.float32)


if __name__ == "__main__":
    key = jax.random.PRNGKey(0)
    k_cond, k_g, k_w1, k_b1, k_w2, k_b2 = jax.random.split(key, 6)

    # Deterministic synthetic parameters (shapes follow SigmaBlock.__init__).
    gaussian = jax.random.normal(k_g, (1, 64), jnp.float32)           # RFF buffer
    w1 = jax.random.normal(k_w1, (128, 512), jnp.float32) * (1.0 / math.sqrt(128))
    b1 = jax.random.normal(k_b1, (512,), jnp.float32) * 0.01
    w2 = jax.random.normal(k_w2, (512, 512), jnp.float32) * (1.0 / math.sqrt(512))
    b2 = jax.random.normal(k_b2, (512,), jnp.float32) * 0.01

    params = prepare_sigma_block_params(gaussian, w1, b1, w2, b2)
    bf16_silu = _has_bf16_vpu()

    # Aligned small batch (8), non-multiple-of-8 batch (11), and a multi-tile
    # batch (600 -> two balanced 304-row tiles) to exercise the grid path.
    for B in (8, 11, 600):
        kc = jax.random.fold_in(k_cond, B)
        cond = jax.random.uniform(kc, (B,), jnp.float32, minval=0.01, maxval=10.0)

        out = sigma_block(cond, params, bf16_silu=bf16_silu)
        out = jax.block_until_ready(out)
        assert out.shape == (B, 512), out.shape

        # Tight-ish check vs a precision-matched reference (same bf16 rounding).
        ref_m = reference_matched(cond, params, bf16_silu)
        assert jnp.allclose(out, ref_m, atol=2e-2, rtol=2e-2), \
            "mismatch vs matched-precision reference"

        # Loose check vs the full-f32 PyTorch-equivalent reference (bf16
        # weights/activations introduce <~1% error; semantics unchanged).
        ref = reference_f32(cond, gaussian, w1, b1, w2, b2)
        assert jnp.allclose(out, ref, atol=5e-2, rtol=5e-2), \
            "mismatch vs f32 reference"

    print("KERNEL_OK")
</pallas_src>

<mosaic_0001>
module attributes {stable_mosaic.version = 11 : i64} {
  func.func @kernel(%arg0: i32, %arg1: memref<8x1xf32, #tpu.memory_space<vmem>>, %arg2: memref<1x128xf32, #tpu.memory_space<vmem>>, %arg3: memref<1x128xf32, #tpu.memory_space<vmem>>, %arg4: memref<128x512xbf16, #tpu.memory_space<vmem>>, %arg5: memref<1x512xf32, #tpu.memory_space<vmem>>, %arg6: memref<512x512xbf16, #tpu.memory_space<vmem>>, %arg7: memref<1x512xf32, #tpu.memory_space<vmem>>, %arg8: memref<8x512xf32, #tpu.memory_space<vmem>>) attributes {dimension_semantics = [#tpu.dimension_semantics<parallel>], iteration_bounds = array<i64: 1>, scalar_prefetch = 0 : i64, scratch_operands = 0 : i64, tpu.core_type = #tpu.core_type<tc>, window_params = [{transform_indices = @transform_0, window_bounds = array<i64: 8, 1>}, {pipeline_mode = #tpu.pipeline_mode<synchronous>, transform_indices = @transform_1, window_bounds = array<i64: 1, 128>}, {pipeline_mode = #tpu.pipeline_mode<synchronous>, transform_indices = @transform_2, window_bounds = array<i64: 1, 128>}, {pipeline_mode = #tpu.pipeline_mode<synchronous>, transform_indices = @transform_3, window_bounds = array<i64: 128, 512>}, {pipeline_mode = #tpu.pipeline_mode<synchronous>, transform_indices = @transform_4, window_bounds = array<i64: 1, 512>}, {pipeline_mode = #tpu.pipeline_mode<synchronous>, transform_indices = @transform_5, window_bounds = array<i64: 512, 512>}, {pipeline_mode = #tpu.pipeline_mode<synchronous>, transform_indices = @transform_6, window_bounds = array<i64: 1, 512>}, {transform_indices = @transform_7, window_bounds = array<i64: 8, 512>}]} {
    %c0 = arith.constant 0 : index
    %c0_0 = arith.constant 0 : index
    %0 = vector.load %arg1[%c0, %c0_0] : memref<8x1xf32, #tpu.memory_space<vmem>>, vector<8x1xf32>
    %1 = math.log %0 : vector<8x1xf32>
    %cst = arith.constant 0.434294492 : f32
    %2 = vector.broadcast %cst : f32 to vector<8x1xf32>
    %3 = arith.mulf %1, %2 : vector<8x1xf32>
    %c0_1 = arith.constant 0 : index
    %c0_2 = arith.constant 0 : index
    %4 = vector.load %arg2[%c0_1, %c0_2] : memref<1x128xf32, #tpu.memory_space<vmem>>, vector<1x128xf32>
    %5 = vector.broadcast %3 : vector<8x1xf32> to vector<8x128xf32>
    %6 = vector.broadcast %4 : vector<1x128xf32> to vector<8x128xf32>
    %7 = arith.mulf %5, %6 : vector<8x128xf32>
    %c0_3 = arith.constant 0 : index
    %c0_4 = arith.constant 0 : index
    %8 = vector.load %arg3[%c0_3, %c0_4] : memref<1x128xf32, #tpu.memory_space<vmem>>, vector<1x128xf32>
    %9 = vector.broadcast %8 : vector<1x128xf32> to vector<8x128xf32>
    %10 = arith.addf %7, %9 : vector<8x128xf32>
    %11 = math.sin %10 : vector<8x128xf32>
    %12 = arith.truncf %11 : vector<8x128xf32> to vector<8x128xbf16>
    %c0_5 = arith.constant 0 : index
    %c0_6 = arith.constant 0 : index
    %13 = vector.load %arg4[%c0_5, %c0_6] : memref<128x512xbf16, #tpu.memory_space<vmem>>, vector<128x512xbf16>
    %cst_7 = arith.constant dense<0.000000e+00> : vector<8x512xf32>
    %14 = tpu.matmul %12, %13, %cst_7 {dimension_numbers = #tpu.dot_dimension_numbers<[1], [0], [0], [1], [0, 0, 1, 1], [], []>} : vector<8x128xbf16>, vector<128x512xbf16>, vector<8x512xf32> -> vector<8x512xf32>
    %c0_8 = arith.constant 0 : index
    %c0_9 = arith.constant 0 : index
    %15 = vector.load %arg5[%c0_8, %c0_9] : memref<1x512xf32, #tpu.memory_space<vmem>>, vector<1x512xf32>
    %16 = vector.broadcast %15 : vector<1x512xf32> to vector<8x512xf32>
    %17 = arith.addf %14, %16 : vector<8x512xf32>
    %18 = arith.truncf %17 : vector<8x512xf32> to vector<8x512xbf16>
    %19 = arith.negf %18 : vector<8x512xbf16>
    %20 = math.exp %19 : vector<8x512xbf16>
    %cst_10 = arith.constant 1.000000e+00 : bf16
    %21 = vector.broadcast %cst_10 : bf16 to vector<8x512xbf16>
    %22 = arith.addf %21, %20 : vector<8x512xbf16>
    %23 = arith.divf %21, %22 : vector<8x512xbf16>
    %24 = arith.mulf %18, %23 : vector<8x512xbf16>
    %c0_11 = arith.constant 0 : index
    %c0_12 = arith.constant 0 : index
    %25 = vector.load %arg6[%c0_11, %c0_12] : memref<512x512xbf16, #tpu.memory_space<vmem>>, vector<512x512xbf16>
    %cst_13 = arith.constant dense<0.000000e+00> : vector<8x512xf32>
    %26 = tpu.matmul %24, %25, %cst_13 {dimension_numbers = #tpu.dot_dimension_numbers<[1], [0], [0], [1], [0, 0, 1, 1], [], []>} : vector<8x512xbf16>, vector<512x512xbf16>, vector<8x512xf32> -> vector<8x512xf32>
    %c0_14 = arith.constant 0 : index
    %c0_15 = arith.constant 0 : index
    %27 = vector.load %arg7[%c0_14, %c0_15] : memref<1x512xf32, #tpu.memory_space<vmem>>, vector<1x512xf32>
    %28 = vector.broadcast %27 : vector<1x512xf32> to vector<8x512xf32>
    %29 = arith.addf %26, %28 : vector<8x512xf32>
    %30 = arith.truncf %29 : vector<8x512xf32> to vector<8x512xbf16>
    %31 = arith.negf %30 : vector<8x512xbf16>
    %32 = math.exp %31 : vector<8x512xbf16>
    %cst_16 = arith.constant 1.000000e+00 : bf16
    %33 = vector.broadcast %cst_16 : bf16 to vector<8x512xbf16>
    %34 = arith.addf %33, %32 : vector<8x512xbf16>
    %35 = arith.divf %33, %34 : vector<8x512xbf16>
    %36 = arith.mulf %30, %35 : vector<8x512xbf16>
    %37 = arith.extf %36 : vector<8x512xbf16> to vector<8x512xf32>
    %c0_17 = arith.constant 0 : index
    %c0_18 = arith.constant 0 : index
    %38 = vector.load %arg8[%c0_17, %c0_18] : memref<8x512xf32, #tpu.memory_space<vmem>>, vector<8x512xf32>
    tpu.vector_store %arg8[%c0_17, %c0_18], %37 {strides = array<i32>} : memref<8x512xf32, #tpu.memory_space<vmem>>, vector<8x512xf32>,
    return
  }
  func.func @transform_0(%arg0: i32) -> (i32, i32) {
    %c0_i32 = arith.constant 0 : i32
    %c0_i32_0 = arith.constant 0 : i32
    return %arg0, %c0_i32 : i32, i32
  }
  func.func @transform_1(%arg0: i32) -> (i32, i32) {
    %c0_i32 = arith.constant 0 : i32
    %c0_i32_0 = arith.constant 0 : i32
    %c0_i32_1 = arith.constant 0 : i32
    return %c0_i32, %c0_i32_0 : i32, i32
  }
  func.func @transform_2(%arg0: i32) -> (i32, i32) {
    %c0_i32 = arith.constant 0 : i32
    %c0_i32_0 = arith.constant 0 : i32
    %c0_i32_1 = arith.constant 0 : i32
    return %c0_i32, %c0_i32_0 : i32, i32
  }
  func.func @transform_3(%arg0: i32) -> (i32, i32) {
    %c0_i32 = arith.constant 0 : i32
    %c0_i32_0 = arith.constant 0 : i32
    %c0_i32_1 = arith.constant 0 : i32
    return %c0_i32, %c0_i32_0 : i32, i32
  }
  func.func @transform_4(%arg0: i32) -> (i32, i32) {
    %c0_i32 = arith.constant 0 : i32
    %c0_i32_0 = arith.constant 0 : i32
    %c0_i32_1 = arith.constant 0 : i32
    return %c0_i32, %c0_i32_0 : i32, i32
  }
  func.func @transform_5(%arg0: i32) -> (i32, i32) {
    %c0_i32 = arith.constant 0 : i32
    %c0_i32_0 = arith.constant 0 : i32
    %c0_i32_1 = arith.constant 0 : i32
    return %c0_i32, %c0_i32_0 : i32, i32
  }
  func.func @transform_6(%arg0: i32) -> (i32, i32) {
    %c0_i32 = arith.constant 0 : i32
    %c0_i32_0 = arith.constant 0 : i32
    %c0_i32_1 = arith.constant 0 : i32
    return %c0_i32, %c0_i32_0 : i32, i32
  }
  func.func @transform_7(%arg0: i32) -> (i32, i32) {
    %c0_i32 = arith.constant 0 : i32
    %c0_i32_0 = arith.constant 0 : i32
    return %arg0, %c0_i32 : i32, i32
  }
}

</mosaic_0001>

<llo_original>
// kernel: tpu_custom_call.1
$region0: #{tpu_custom_call.1}
  #allocation0 [shape = 'u32[]', space=smem, size = 0x4, offset = 0x4, fixed_abs, tag = 'smem constant byte address 0x4 - core index']
  #allocation1 [shape = 'u32[72,128]{1,0:T(1,128)}', space=vmem, size = 0x9000, scoped, tag = 'internal scratch']
  %s0 = inlined_call_operand.vmem [shape: f32[8,1], index: 0, kind: input, shape index: {}]
  %s1 = inlined_call_operand.vmem [shape: f32[1,128], index: 1, kind: input, shape index: {}]
  %s2 = inlined_call_operand.vmem [shape: f32[1,128], index: 2, kind: input, shape index: {}]
  %s3 = inlined_call_operand.hbm [shape: bf16[128,512], index: 3, kind: input, shape index: {}]
  %s4 = inlined_call_operand.vmem [shape: f32[1,512], index: 4, kind: input, shape index: {}]
  %s5 = inlined_call_operand.hbm [shape: bf16[512,512], index: 5, kind: input, shape index: {}]
  %s6 = inlined_call_operand.vmem [shape: f32[1,512], index: 6, kind: input, shape index: {}]
  %s7 = inlined_call_operand.hbm [shape: f32[8,512], index: 7, kind: output, shape index: {}]
  %s8 = sld [smem:[#allocation0]]
  $region46: #{tpu_custom_call.1} parent=0
    _
  %s10 = ssub.s32 1, %s8
  %s11 = scalar_select 0, %s10, %s8
  $region1: #{tpu_custom_call.1} parent=0
    #allocation2 [shape = 'u8[131072]{0}', space=vmem, size = 0x20000, scoped, tag = 'input window, operand 3, single buffered']
    #allocation3 [shape = 's32[1]{0}', space=sflag, size = 0x4, scoped, tag = 'scoped memory for tpu_custom_call.1']
    #allocation4 [shape = 's32[1]{0}', space=sflag, size = 0x4, scoped, tag = 'scoped memory for tpu_custom_call.1']
    #allocation5 [shape = 'u8[524288]{0}', space=vmem, size = 0x80000, scoped, tag = 'input window, operand 5, single buffered']
    #allocation6 [shape = 's32[1]{0}', space=sflag, size = 0x4, scoped, tag = 'scoped memory for tpu_custom_call.1']
    #allocation7 [shape = 'u8[16384]{0}', space=vmem, size = 0x4000, scoped, tag = 'output window, operand 0, single buffered']
    %12 = vsyncpa [#allocation3], 0
    %13 = vsyncpa [#allocation6], 0
    %14 = vsyncpa [#allocation4], 0
    // Predicated region
    $region2: #{tpu_custom_call.1} parent=1 // pred_check
      _
    $region3: #{tpu_custom_call.1} parent=1 // pred_check_branch
      %16 = sbr.rel (0) target = $region5
    $region4: #{tpu_custom_call.1} parent=1 // pred_region
      _
    $region5: #{tpu_custom_call.1} parent=1 // pred_fallthru
      _
    // Predicated region
    $region6: #{tpu_custom_call.1} parent=1 // pred_check
      _
    $region7: #{tpu_custom_call.1} parent=1 // pred_check_branch
      %18 = sbr.rel (0) target = $region9
    $region8: #{tpu_custom_call.1} parent=1 // pred_region
      _
    $region9: #{tpu_custom_call.1} parent=1 // pred_fallthru
      _
    // Predicated region
    $region10: #{tpu_custom_call.1} parent=1 // pred_check
      _
    $region11: #{tpu_custom_call.1} parent=1 // pred_check_branch
      %20 = sbr.rel (0) target = $region13
    $region12: #{tpu_custom_call.1} parent=1 // pred_region
      _
    $region13: #{tpu_custom_call.1} parent=1 // pred_fallthru
      _
    // Predicated region
    $region14: #{tpu_custom_call.1} parent=1 // pred_check
      _
    $region15: #{tpu_custom_call.1} parent=1 // pred_check_branch
      %22 = sbr.rel (0) target = $region17
    $region16: #{tpu_custom_call.1} parent=1 // pred_region
      %24 = vsyncadd [#allocation3], 0
      %s25 = sshll.u32 %s3, 4
      %s26 = int_to_ptr.hbm [resolvable:$true] %s25
      %s27 = sshll.u32 [#allocation2], 4
      %s28 = int_to_ptr.vmem [resolvable:$true] %s27
      %33 = dma.hbm_to_vmem [thread:$0]  %s26, 4096, %s28, [#allocation3], 256, 256, 16
    $region17: #{tpu_custom_call.1} parent=1 // pred_fallthru
      _
    // Predicated region
    $region18: #{tpu_custom_call.1} parent=1 // pred_check
      _
    $region19: #{tpu_custom_call.1} parent=1 // pred_check_branch
      %35 = sbr.rel (0) target = $region21
    $region20: #{tpu_custom_call.1} parent=1 // pred_region
      _
    $region21: #{tpu_custom_call.1} parent=1 // pred_fallthru
      _
    // Predicated region
    $region22: #{tpu_custom_call.1} parent=1 // pred_check
      _
    $region23: #{tpu_custom_call.1} parent=1 // pred_check_branch
      %37 = sbr.rel (0) target = $region25
    $region24: #{tpu_custom_call.1} parent=1 // pred_region
      %39 = vsyncadd [#allocation6], 0
      %s40 = sshll.u32 %s5, 4
      %s41 = int_to_ptr.hbm [resolvable:$true] %s40
      %s42 = sshll.u32 [#allocation5], 4
      %s43 = int_to_ptr.vmem [resolvable:$true] %s42
      %48 = dma.hbm_to_vmem [thread:$0]  %s41, 16384, %s43, [#allocation6], 256, 256, 16
    $region25: #{tpu_custom_call.1} parent=1 // pred_fallthru
      _
    // Predicated region
    $region26: #{tpu_custom_call.1} parent=1 // pred_check
      _
    $region27: #{tpu_custom_call.1} parent=1 // pred_check_branch
      %50 = sbr.rel (0) target = $region29
    $region28: #{tpu_custom_call.1} parent=1 // pred_region
      _
    $region29: #{tpu_custom_call.1} parent=1 // pred_fallthru
      _
    // Predicated region
    $region30: #{tpu_custom_call.1} parent=1 // pred_check
      _
    $region31: #{tpu_custom_call.1} parent=1 // pred_check_branch
      %52 = sbr.rel (0) target = $region33
    $region32: #{tpu_custom_call.1} parent=1 // pred_region
      %54 = dma.done [#allocation3], 4096
    $region33: #{tpu_custom_call.1} parent=1 // pred_fallthru
      _
    // Predicated region
    $region34: #{tpu_custom_call.1} parent=1 // pred_check
      _
    $region35: #{tpu_custom_call.1} parent=1 // pred_check_branch
      %56 = sbr.rel (0) target = $region37
    $region36: #{tpu_custom_call.1} parent=1 // pred_region
      %58 = dma.done [#allocation6], 16384
    $region37: #{tpu_custom_call.1} parent=1 // pred_fallthru
      _
    %v60 = vld [vmem:[%s0] sm:$0xff]
    %v61 = vlog2.pop %v60
    %v62 = vmul.f32 %v61, 0.6931472
    %v63 = vmul.f32 %v62, 0.4342945
    %v64 = vld [vmem:[%s1] sm:$0x1]
    %66 = vset.pattern.permute.xlu0 0
    %67 = vperm.xlu0 %66, %v63
    %v68 = vpop.permute.xlu0 %67
    %v71 = vperm.slane %v64, 0
    %v73 = vmul.f32 %v68, %v71
    %v74 = vld [vmem:[%s2] sm:$0x1]
    %v76 = vperm.slane %v74, 0
    %v78 = vadd.f32 %v73, %v76
    %v79 = vand.u32 2147483647, %v78
    %vm80 = vcmp.le.f32.partialorder %v79, 0.7853982
    %vm81 = vcmp.lt.s32.totalorder %v78, 0
    %v82 = vand.u32 %v78, 2139095040
    %v83 = vshrl.u32 %v82, 23
    %v84 = vsub.s32 %v83, 127
    %v85 = vand.u32 2147483647, %v78
    %v86 = vand.u32 %v85, 8388607
    %v87 = vor.u32 %v86, 8388608
    %v88 = vsub.s32 0, %v87
    %v89 = vadd.s32 %v84, 1
    %vm90 = vcmp.gt.s32.totalorder %v89, 0
    %v91 = vsel %vm90, %v89, 0
    %v92 = vshrl.u32 %v91, 5
    %v93 = vand.u32 %v91, 31
    %v94 = vsub.s32 32, %v93
    %v95 = vshrl.u32 683565275, %v94
    %v96 = vshll.u32 683565275, %v93
    %v97 = vshrl.u32 2475754826, %v94
    %v98 = vor.u32 %v96, %v97
    %v99 = vshll.u32 2475754826, %v93
    %v100 = vshrl.u32 2131351028, %v94
    %v101 = vor.u32 %v99, %v100
    %v102 = vshll.u32 2131351028, %v93
    %v103 = vshrl.u32 2102212464, %v94
    %v104 = vor.u32 %v102, %v103
    %v105 = vshll.u32 2102212464, %v93
    %v106 = vshrl.u32 920167782, %v94
    %v107 = vor.u32 %v105, %v106
    %v108 = vshll.u32 920167782, %v93
    %v109 = vshrl.u32 1326507024, %v94
    %v110 = vor.u32 %v108, %v109
    %vm111 = vcmp.lt.s32.totalorder %v92, 1
    %vm112 = vcmp.lt.s32.totalorder %v92, 2
    %vm113 = vcmp.lt.s32.totalorder %v92, 3
    %vm114 = vcmp.lt.s32.totalorder %v92, 4
    %v115 = vsel %vm111, %v95, %v98
    %v116 = vsel %vm114, %v104, 2102212464
    %v117 = vsel %vm113, %v101, %v116
    %v118 = vsel %vm112, %v115, %v117
    %v119 = vsel %vm111, %v98, %v101
    %v120 = vsel %vm114, %v107, 920167782
    %v121 = vsel %vm113, %v104, %v120
    %v122 = vsel %vm112, %v119, %v121
    %v123 = vsel %vm111, %v101, %v104
    %v124 = vsel %vm114, %v110, 1326507024
    %v125 = vsel %vm113, %v107, %v124
    %v126 = vsel %vm112, %v123, %v125
    %v127 = vshll.u32 %v87, 8
    %v128 = vand.u32 %v127, 65535
    %v129 = vshrl.u32 %v127, 16
    %v130 = vand.u32 %v126, 65535
    %v131 = vshrl.u32 %v126, 16
    %v132 = vmul.u32 %v128, %v130
    %v133 = vmul.u32 %v128, %v131
    %v134 = vmul.u32 %v129, %v130
    %v135 = vmul.u32 %v129, %v131
    %v136 = vshll.u32 %v133, 16
    %v137 = vshrl.u32 %v133, 16
    %v138 = vshll.u32 %v134, 16
    %v139 = vshrl.u32 %v134, 16
    %vm140 = vc.u32 %v132, %v136
    %v141 = vsel %vm140, 1, 0
    %v142 = vadd.s32 %v132, %v136
    %v143 = vadd.s32 %v135, %v141
    %vm144 = vc.u32 %v142, %v138
    %v145 = vsel %vm144, 1, 0
    %v146 = vadd.s32 %v142, %v138
    %v147 = vadd.s32 %v143, %v145
    %v148 = vadd.s32 %v147, %v137
    %v149 = vadd.s32 %v148, %v139
    %v150 = vand.u32 %v127, 65535
    %v151 = vshrl.u32 %v127, 16
    %v152 = vand.u32 %v122, 65535
    %v153 = vshrl.u32 %v122, 16
    %v154 = vmul.u32 %v150, %v152
    %v155 = vmul.u32 %v150, %v153
    %v156 = vmul.u32 %v151, %v152
    %v157 = vmul.u32 %v151, %v153
    %v158 = vshll.u32 %v155, 16
    %v159 = vshrl.u32 %v155, 16
    %v160 = vshll.u32 %v156, 16
    %v161 = vshrl.u32 %v156, 16
    %vm162 = vc.u32 %v154, %v158
    %v163 = vsel %vm162, 1, 0
    %v164 = vadd.s32 %v154, %v158
    %v165 = vadd.s32 %v157, %v163
    %vm166 = vc.u32 %v164, %v160
    %v167 = vsel %vm166, 1, 0
    %v168 = vadd.s32 %v164, %v160
    %v169 = vadd.s32 %v165, %v167
    %v170 = vadd.s32 %v169, %v159
    %v171 = vadd.s32 %v170, %v161
    %v172 = vmul.u32 %v127, %v118
    %v173 = vadd.s32 %v149, %v168
    %vm174 = vc.u32 %v149, %v168
    %v175 = vadd.s32 %v171, 1
    %v176 = vsel %vm174, %v175, %v171
    %v177 = vadd.s32 %v172, %v176
    %v178 = vadd.s32 %v177, 536870912
    %v179 = vshrl.u32 %v178, 30
    %v180 = vshll.u32 %v179, 30
    %v181 = vsub.s32 %v177, %v180
    %vm182 = vcmp.lt.s32.totalorder %v181, 0
    %v183 = vsub.s32 0, %v181
    %v184 = vsel %vm182, %v183, %v181
    %v185 = vclz %v184
    %v186 = vsub.s32 %v185, 2
    %vm187 = vcmp.gt.s32.totalorder 0, %v186
    %v188 = vsel %vm187, 0, %v186
    %v189 = vsub.s32 32, %v188
    %v190 = vshll.u32 %v181, %v188
    %v191 = vshrl.u32 %v173, %v189
    %v192 = vor.u32 %v190, %v191
    %v193 = vsub.s32 4294967266, %v188
    %v194 = vadd.s32 %v193, 127
    %v195 = vshll.u32 %v194, 23
    %v196 = vor.u32 4788187, %v195
    %v197 = vand.u32 2147483647, %v196
    %v199 = vcvt.s32.f32 %v192
    %v200 = vmul.f32 %v199, %v197
    %v201 = vxor.u32 %v200, 2147483648
    %v202 = vsel %vm81, %v201, %v200
    %v203 = vsub.s32 4, %v179
    %v204 = vsel %vm81, %v203, %v179
    %v205 = vsel %vm80, %v78, %v202
    %v206 = vsel %vm80, 0, %v204
    %v207 = vmul.f32 %v205, %v205
    %v208 = vmul.f32 %v207, -0.001358992
    %v209 = vadd.f32 %v208, 0.041655596
    %v210 = vmul.f32 %v207, %v209
    %v211 = vadd.f32 %v210, -0.4999988
    %v212 = vmul.f32 %v207, %v211
    %v213 = vadd.f32 1.0, %v212
    %v214 = vmul.f32 %v205, %v205
    %v215 = vmul.f32 %v214, -0.00019511016
    %v216 = vadd.f32 %v215, 0.008332121
    %v217 = vmul.f32 %v214, %v216
    %v218 = vadd.f32 %v217, -0.16666654
    %v219 = vmul.f32 %v214, %v218
    %v220 = vadd.f32 %v219, 1.0
    %v221 = vmul.f32 %v220, %v205
    %vm222 = vweird.f32 %v78
    %v223 = vadd.s32 %v206, 3
    %v224 = vand.u32 %v223, 3
    %vm225 = vcmp.lt.s32.totalorder %v224, 2
    %vm226 = vcmp.eq.s32.totalorder %v224, 0
    %v227 = vxor.u32 %v221, 2147483648
    %v228 = vsel %vm226, %v213, %v227
    %vm229 = vcmp.eq.s32.totalorder %v224, 2
    %v230 = vxor.u32 %v213, 2147483648
    %v231 = vsel %vm229, %v230, %v221
    %v232 = vsel %vm225, %v228, %v231
    %v233 = vsel %vm222, nan, %v232
    %v234 = vpack.c.bf16 %v233, %v233
    %v235 = vld [vmem:[#allocation2] sm:$0xff]
    %v236 = vld [vmem:[#allocation2 + $0x8] sm:$0xff]
    %v237 = vld [vmem:[#allocation2 + $0x10] sm:$0xff]
    %v238 = vld [vmem:[#allocation2 + $0x18] sm:$0xff]
    %v239 = vld [vmem:[#allocation2 + $0x20] sm:$0xff]
    %v240 = vld [vmem:[#allocation2 + $0x28] sm:$0xff]
    %v241 = vld [vmem:[#allocation2 + $0x30] sm:$0xff]
    %v242 = vld [vmem:[#allocation2 + $0x38] sm:$0xff]
    %v243 = vld [vmem:[#allocation2 + $0x40] sm:$0xff]
    %v244 = vld [vmem:[#allocation2 + $0x48] sm:$0xff]
    %v245 = vld [vmem:[#allocation2 + $0x50] sm:$0xff]
    %v246 = vld [vmem:[#allocation2 + $0x58] sm:$0xff]
    %v247 = vld [vmem:[#allocation2 + $0x60] sm:$0xff]
    %v248 = vld [vmem:[#allocation2 + $0x68] sm:$0xff]
    %v249 = vld [vmem:[#allocation2 + $0x70] sm:$0xff]
    %v250 = vld [vmem:[#allocation2 + $0x78] sm:$0xff]
    %v251 = vld [vmem:[#allocation2 + $0x80] sm:$0xff]
    %v252 = vld [vmem:[#allocation2 + $0x88] sm:$0xff]
    %v253 = vld [vmem:[#allocation2 + $0x90] sm:$0xff]
    %v254 = vld [vmem:[#allocation2 + $0x98] sm:$0xff]
    %v255 = vld [vmem:[#allocation2 + $0xa0] sm:$0xff]
    %v256 = vld [vmem:[#allocation2 + $0xa8] sm:$0xff]
    %v257 = vld [vmem:[#allocation2 + $0xb0] sm:$0xff]
    %v258 = vld [vmem:[#allocation2 + $0xb8] sm:$0xff]
    %v259 = vld [vmem:[#allocation2 + $0xc0] sm:$0xff]
    %v260 = vld [vmem:[#allocation2 + $0xc8] sm:$0xff]
    %v261 = vld [vmem:[#allocation2 + $0xd0] sm:$0xff]
    %v262 = vld [vmem:[#allocation2 + $0xd8] sm:$0xff]
    %v263 = vld [vmem:[#allocation2 + $0xe0] sm:$0xff]
    %v264 = vld [vmem:[#allocation2 + $0xe8] sm:$0xff]
    %v265 = vld [vmem:[#allocation2 + $0xf0] sm:$0xff]
    %v266 = vld [vmem:[#allocation2 + $0xf8] sm:$0xff]
    %v267 = vld [vmem:[%s4] sm:$0xf]
    %v269 = vperm.slane %v267, 0
    %v270 = vperm.slane %v267, 1
    %v271 = vperm.slane %v267, 2
    %v272 = vperm.slane %v267, 3
    %v309 = vunpack.c.l.b16 %v235
    %v310 = vunpack.c.h.b16 %v235
    %v311 = vunpack.c.l.b16 %v236
    %v312 = vunpack.c.h.b16 %v236
    %v313 = vunpack.c.l.b16 %v237
    %v314 = vunpack.c.h.b16 %v237
    %v315 = vunpack.c.l.b16 %v238
    %v316 = vunpack.c.h.b16 %v238
    %v317 = vunpack.c.l.b16 %v239
    %v318 = vunpack.c.h.b16 %v239
    %v319 = vunpack.c.l.b16 %v240
    %v320 = vunpack.c.h.b16 %v240
    %v321 = vunpack.c.l.b16 %v241
    %v322 = vunpack.c.h.b16 %v241
    %v323 = vunpack.c.l.b16 %v242
    %v324 = vunpack.c.h.b16 %v242
    %v325 = vunpack.c.l.b16 %v243
    %v326 = vunpack.c.h.b16 %v243
    %v327 = vunpack.c.l.b16 %v244
    %v328 = vunpack.c.h.b16 %v244
    %v329 = vunpack.c.l.b16 %v245
    %v330 = vunpack.c.h.b16 %v245
    %v331 = vunpack.c.l.b16 %v246
    %v332 = vunpack.c.h.b16 %v246
    %v333 = vunpack.c.l.b16 %v247
    %v334 = vunpack.c.h.b16 %v247
    %v335 = vunpack.c.l.b16 %v248
    %v336 = vunpack.c.h.b16 %v248
    %v337 = vunpack.c.l.b16 %v249
    %v338 = vunpack.c.h.b16 %v249
    %v339 = vunpack.c.l.b16 %v250
    %v340 = vunpack.c.h.b16 %v250
    %v341 = vunpack.c.l.b16 %v251
    %v342 = vunpack.c.h.b16 %v251
    %v343 = vunpack.c.l.b16 %v252
    %v344 = vunpack.c.h.b16 %v252
    %v345 = vunpack.c.l.b16 %v253
    %v346 = vunpack.c.h.b16 %v253
    %v347 = vunpack.c.l.b16 %v254
    %v348 = vunpack.c.h.b16 %v254
    %v349 = vunpack.c.l.b16 %v255
    %v350 = vunpack.c.h.b16 %v255
    %v351 = vunpack.c.l.b16 %v256
    %v352 = vunpack.c.h.b16 %v256
    %v353 = vunpack.c.l.b16 %v257
    %v354 = vunpack.c.h.b16 %v257
    %v355 = vunpack.c.l.b16 %v258
    %v356 = vunpack.c.h.b16 %v258
    %v357 = vunpack.c.l.b16 %v259
    %v358 = vunpack.c.h.b16 %v259
    %v359 = vunpack.c.l.b16 %v260
    %v360 = vunpack.c.h.b16 %v260
    %v361 = vunpack.c.l.b16 %v261
    %v362 = vunpack.c.h.b16 %v261
    %v363 = vunpack.c.l.b16 %v262
    %v364 = vunpack.c.h.b16 %v262
    %v365 = vunpack.c.l.b16 %v263
    %v366 = vunpack.c.h.b16 %v263
    %v367 = vunpack.c.l.b16 %v264
    %v368 = vunpack.c.h.b16 %v264
    %v369 = vunpack.c.l.b16 %v265
    %v370 = vunpack.c.h.b16 %v265
    %v371 = vunpack.c.l.b16 %v266
    %v372 = vunpack.c.h.b16 %v266
    %v373 = vpack.c.b16 %v313, %v309
    %v374 = vpack.c.b16 %v314, %v310
    %v375 = vpack.c.b16 %v315, %v311
    %v376 = vpack.c.b16 %v316, %v312
    %v377 = vpack.c.b16 %v321, %v317
    %v378 = vpack.c.b16 %v322, %v318
    %v379 = vpack.c.b16 %v323, %v319
    %v380 = vpack.c.b16 %v324, %v320
    %v381 = vpack.c.b16 %v329, %v325
    %v382 = vpack.c.b16 %v330, %v326
    %v383 = vpack.c.b16 %v331, %v327
    %v384 = vpack.c.b16 %v332, %v328
    %v385 = vpack.c.b16 %v337, %v333
    %v386 = vpack.c.b16 %v338, %v334
    %v387 = vpack.c.b16 %v339, %v335
    %v388 = vpack.c.b16 %v340, %v336
    %v389 = vpack.c.b16 %v345, %v341
    %v390 = vpack.c.b16 %v346, %v342
    %v391 = vpack.c.b16 %v347, %v343
    %v392 = vpack.c.b16 %v348, %v344
    %v393 = vpack.c.b16 %v353, %v349
    %v394 = vpack.c.b16 %v354, %v350
    %v395 = vpack.c.b16 %v355, %v351
    %v396 = vpack.c.b16 %v356, %v352
    %v397 = vpack.c.b16 %v361, %v357
    %v398 = vpack.c.b16 %v362, %v358
    %v399 = vpack.c.b16 %v363, %v359
    %v400 = vpack.c.b16 %v364, %v360
    %v401 = vpack.c.b16 %v369, %v365
    %v402 = vpack.c.b16 %v370, %v366
    %v403 = vpack.c.b16 %v371, %v367
    %v404 = vpack.c.b16 %v372, %v368
    %437 = vmatpush.bf16.msra.mxu0 %v401
    %438 = vmatpush.bf16.msra.mxu0 %v397
    %439 = vmatpush.bf16.msra.mxu0 %v393
    %440 = vmatpush.bf16.msra.mxu0 %v389
    %441 = vmatpush.bf16.msra.mxu0 %v385
    %442 = vmatpush.bf16.msra.mxu0 %v381
    %443 = vmatpush.bf16.msra.mxu0 %v377
    %444 = vmatpush.bf16.msra.mxu0 %v373
    %445 = vmatmul.bf16.gmra.mxu0 %v234
    %v446 = vpop.f32.mrf.mxu0
    %v447 = vadd.f32 %v269, %v446
    %v448 = vpop.f32.mrf.mxu0
    %449 = vdwg.mxu0
    %450 = vmatpush.bf16.msra.mxu0 %v402
    %451 = vmatpush.bf16.msra.mxu0 %v398
    %452 = vmatpush.bf16.msra.mxu0 %v394
    %453 = vmatpush.bf16.msra.mxu0 %v390
    %454 = vmatpush.bf16.msra.mxu0 %v386
    %455 = vmatpush.bf16.msra.mxu0 %v382
    %456 = vmatpush.bf16.msra.mxu0 %v378
    %457 = vmatpush.bf16.msra.mxu0 %v374
    %458 = vmatmul.bf16.gmra.mxu0 %v234
    %v459 = vpop.f32.mrf.mxu0
    %v460 = vadd.f32 %v270, %v459
    %v461 = vpop.f32.mrf.mxu0
    %462 = vdwg.mxu0
    %463 = vmatpush.bf16.msra.mxu0 %v403
    %464 = vmatpush.bf16.msra.mxu0 %v399
    %465 = vmatpush.bf16.msra.mxu0 %v395
    %466 = vmatpush.bf16.msra.mxu0 %v391
    %467 = vmatpush.bf16.msra.mxu0 %v387
    %468 = vmatpush.bf16.msra.mxu0 %v383
    %469 = vmatpush.bf16.msra.mxu0 %v379
    %470 = vmatpush.bf16.msra.mxu0 %v375
    %471 = vmatmul.bf16.gmra.mxu0 %v234
    %v472 = vpop.f32.mrf.mxu0
    %v473 = vadd.f32 %v271, %v472
    %v474 = vpop.f32.mrf.mxu0
    %475 = vdwg.mxu0
    %476 = vmatpush.bf16.msra.mxu0 %v404
    %477 = vmatpush.bf16.msra.mxu0 %v400
    %478 = vmatpush.bf16.msra.mxu0 %v396
    %479 = vmatpush.bf16.msra.mxu0 %v392
    %480 = vmatpush.bf16.msra.mxu0 %v388
    %481 = vmatpush.bf16.msra.mxu0 %v384
    %482 = vmatpush.bf16.msra.mxu0 %v380
    %483 = vmatpush.bf16.msra.mxu0 %v376
    %484 = vmatmul.bf16.gmra.mxu0 %v234
    %v485 = vpop.f32.mrf.mxu0
    %v486 = vadd.f32 %v272, %v485
    %v487 = vpop.f32.mrf.mxu0
    %488 = vdwg.mxu0
    %v489 = vpack.c.bf16 %v460, %v447
    %v490 = vpack.c.bf16 %v486, %v473
    %v491 = vxor.u32 %v489, 2147516416
    %v492 = vxor.u32 %v490, 2147516416
    %v493 = vunpack.c.l.bf16 %v491
    %v494 = vunpack.c.h.bf16 %v491
    %v495 = vunpack.c.l.bf16 %v492
    %v496 = vunpack.c.h.bf16 %v492
    %v497 = vmul.f32 %v493, 1.442695
    %v498 = vpow.pop %v497
    %v499 = vmul.f32 %v494, 1.442695
    %v500 = vpow.pop %v499
    %v501 = vmul.f32 %v495, 1.442695
    %v502 = vpow.pop %v501
    %v503 = vmul.f32 %v496, 1.442695
    %v504 = vpow.pop %v503
    %v505 = vpack.c.bf16 %v500, %v498
    %v506 = vpack.c.bf16 %v504, %v502
    %v507 = vunpack.c.l.bf16 %v505
    %v508 = vunpack.c.h.bf16 %v505
    %v509 = vunpack.c.l.bf16 %v506
    %v510 = vunpack.c.h.bf16 %v506
    %v511 = vadd.f32 %v507, 1.0
    %v512 = vadd.f32 %v508, 1.0
    %v513 = vadd.f32 %v509, 1.0
    %v514 = vadd.f32 %v510, 1.0
    %v515 = vpack.c.bf16 %v512, %v511
    %v516 = vpack.c.bf16 %v514, %v513
    %v517 = vunpack.c.h.bf16 1065369472
    %v518 = vunpack.c.l.bf16 1065369472
    %v519 = vunpack.c.h.bf16 %v515
    %v520 = vunpack.c.l.bf16 %v515
    %v521 = vrcp.pop %v519
    %v522 = vmul.f32 %v517, %v521
    %v523 = vrcp.pop %v520
    %v524 = vmul.f32 %v518, %v523
    %v525 = vpack.c.bf16 %v522, %v524
    %v526 = vunpack.c.h.bf16 %v516
    %v527 = vunpack.c.l.bf16 %v516
    %v528 = vrcp.pop %v526
    %v529 = vmul.f32 %v517, %v528
    %v530 = vrcp.pop %v527
    %v531 = vmul.f32 %v518, %v530
    %v532 = vpack.c.bf16 %v529, %v531
    %v533 = vunpack.c.l.bf16 %v489
    %v534 = vunpack.c.h.bf16 %v489
    %v535 = vunpack.c.l.bf16 %v490
    %v536 = vunpack.c.h.bf16 %v490
    %v537 = vunpack.c.l.bf16 %v525
    %v538 = vunpack.c.h.bf16 %v525
    %v539 = vunpack.c.l.bf16 %v532
    %v540 = vunpack.c.h.bf16 %v532
    %v541 = vmul.f32 %v533, %v537
    %v542 = vmul.f32 %v534, %v538
    %v543 = vmul.f32 %v535, %v539
    %v544 = vmul.f32 %v536, %v540
    %v545 = vpack.c.bf16 %v541, %v541
    %v546 = vpack.c.bf16 %v542, %v542
    %v547 = vpack.c.bf16 %v543, %v543
    %v548 = vpack.c.bf16 %v544, %v544
    %v549 = vld [vmem:[#allocation5] sm:$0xff]
    %v550 = vld [vmem:[#allocation5 + $0x8] sm:$0xff]
    %v551 = vld [vmem:[#allocation5 + $0x10] sm:$0xff]
    %v552 = vld [vmem:[#allocation5 + $0x18] sm:$0xff]
    %v553 = vld [vmem:[#allocation5 + $0x20] sm:$0xff]
    %v554 = vld [vmem:[#allocation5 + $0x28] sm:$0xff]
    %v555 = vld [vmem:[#allocation5 + $0x30] sm:$0xff]
    %v556 = vld [vmem:[#allocation5 + $0x38] sm:$0xff]
    %v557 = vld [vmem:[#allocation5 + $0x40] sm:$0xff]
    %v558 = vld [vmem:[#allocation5 + $0x48] sm:$0xff]
    %v559 = vld [vmem:[#allocation5 + $0x50] sm:$0xff]
    %v560 = vld [vmem:[#allocation5 + $0x58] sm:$0xff]
    %v561 = vld [vmem:[#allocation5 + $0x60] sm:$0xff]
    %v562 = vld [vmem:[#allocation5 + $0x68] sm:$0xff]
    %v563 = vld [vmem:[#allocation5 + $0x70] sm:$0xff]
    %v564 = vld [vmem:[#allocation5 + $0x78] sm:$0xff]
    %v565 = vld [vmem:[#allocation5 + $0x80] sm:$0xff]
    %v566 = vld [vmem:[#allocation5 + $0x88] sm:$0xff]
    %v567 = vld [vmem:[#allocation5 + $0x90] sm:$0xff]
    %v568 = vld [vmem:[#allocation5 + $0x98] sm:$0xff]
    %v569 = vld [vmem:[#allocation5 + $0xa0] sm:$0xff]
    %v570 = vld [vmem:[#allocation5 + $0xa8] sm:$0xff]
    %v571 = vld [vmem:[#allocation5 + $0xb0] sm:$0xff]
    %v572 = vld [vmem:[#allocation5 + $0xb8] sm:$0xff]
    %v573 = vld [vmem:[#allocation5 + $0xc0] sm:$0xff]
    %v574 = vld [vmem:[#allocation5 + $0xc8] sm:$0xff]
    %v575 = vld [vmem:[#allocation5 + $0xd0] sm:$0xff]
    %v576 = vld [vmem:[#allocation5 + $0xd8] sm:$0xff]
    %v577 = vld [vmem:[#allocation5 + $0xe0] sm:$0xff]
    %v578 = vld [vmem:[#allocation5 + $0xe8] sm:$0xff]
    %v579 = vld [vmem:[#allocation5 + $0xf0] sm:$0xff]
    %v580 = vld [vmem:[#allocation5 + $0xf8] sm:$0xff]
    %v581 = vld [vmem:[#allocation5 + $0x100] sm:$0xff]
    %v582 = vld [vmem:[#allocation5 + $0x108] sm:$0xff]
    %v583 = vld [vmem:[#allocation5 + $0x110] sm:$0xff]
    %v584 = vld [vmem:[#allocation5 + $0x118] sm:$0xff]
    %v585 = vld [vmem:[#allocation5 + $0x120] sm:$0xff]
    %v586 = vld [vmem:[#allocation5 + $0x128] sm:$0xff]
    %v587 = vld [vmem:[#allocation5 + $0x130] sm:$0xff]
    %v588 = vld [vmem:[#allocation5 + $0x138] sm:$0xff]
    %v589 = vld [vmem:[#allocation5 + $0x140] sm:$0xff]
    %v590 = vld [vmem:[#allocation5 + $0x148] sm:$0xff]
    %v591 = vld [vmem:[#allocation5 + $0x150] sm:$0xff]
    %v592 = vld [vmem:[#allocation5 + $0x158] sm:$0xff]
    %v593 = vld [vmem:[#allocation5 + $0x160] sm:$0xff]
    %v594 = vld [vmem:[#allocation5 + $0x168] sm:$0xff]
    %v595 = vld [vmem:[#allocation5 + $0x170] sm:$0xff]
    %v596 = vld [vmem:[#allocation5 + $0x178] sm:$0xff]
    %v597 = vld [vmem:[#allocation5 + $0x180] sm:$0xff]
    %v598 = vld [vmem:[#allocation5 + $0x188] sm:$0xff]
    %v599 = vld [vmem:[#allocation5 + $0x190] sm:$0xff]
    %v600 = vld [vmem:[#allocation5 + $0x198] sm:$0xff]
    %v601 = vld [vmem:[#allocation5 + $0x1a0] sm:$0xff]
    %v602 = vld [vmem:[#allocation5 + $0x1a8] sm:$0xff]
    %v603 = vld [vmem:[#allocation5 + $0x1b0] sm:$0xff]
    %v604 = vld [vmem:[#allocation5 + $0x1b8] sm:$0xff]
    %v605 = vld [vmem:[#allocation5 + $0x1c0] sm:$0xff]
    %v606 = vld [vmem:[#allocation5 + $0x1c8] sm:$0xff]
    %v607 = vld [vmem:[#allocation5 + $0x1d0] sm:$0xff]
    %v608 = vld [vmem:[#allocation5 + $0x1d8] sm:$0xff]
    %v609 = vld [vmem:[#allocation5 + $0x1e0] sm:$0xff]
    %v610 = vld [vmem:[#allocation5 + $0x1e8] sm:$0xff]
    %v611 = vld [vmem:[#allocation5 + $0x1f0] sm:$0xff]
    %v612 = vld [vmem:[#allocation5 + $0x1f8] sm:$0xff]
    %v613 = vld [vmem:[#allocation5 + $0x200] sm:$0xff]
    %v614 = vld [vmem:[#allocation5 + $0x208] sm:$0xff]
    %v615 = vld [vmem:[#allocation5 + $0x210] sm:$0xff]
    %v616 = vld [vmem:[#allocation5 + $0x218] sm:$0xff]
    %v617 = vld [vmem:[#allocation5 + $0x220] sm:$0xff]
    %v618 = vld [vmem:[#allocation5 + $0x228] sm:$0xff]
    %v619 = vld [vmem:[#allocation5 + $0x230] sm:$0xff]
    %v620 = vld [vmem:[#allocation5 + $0x238] sm:$0xff]
    %v621 = vld [vmem:[#allocation5 + $0x240] sm:$0xff]
    %v622 = vld [vmem:[#allocation5 + $0x248] sm:$0xff]
    %v623 = vld [vmem:[#allocation5 + $0x250] sm:$0xff]
    %v624 = vld [vmem:[#allocation5 + $0x258] sm:$0xff]
    %v625 = vld [vmem:[#allocation5 + $0x260] sm:$0xff]
    %v626 = vld [vmem:[#allocation5 + $0x268] sm:$0xff]
    %v627 = vld [vmem:[#allocation5 + $0x270] sm:$0xff]
    %v628 = vld [vmem:[#allocation5 + $0x278] sm:$0xff]
    %v629 = vld [vmem:[#allocation5 + $0x280] sm:$0xff]
    %v630 = vld [vmem:[#allocation5 + $0x288] sm:$0xff]
    %v631 = vld [vmem:[#allocation5 + $0x290] sm:$0xff]
    %v632 = vld [vmem:[#allocation5 + $0x298] sm:$0xff]
    %v633 = vld [vmem:[#allocation5 + $0x2a0] sm:$0xff]
    %v634 = vld [vmem:[#allocation5 + $0x2a8] sm:$0xff]
    %v635 = vld [vmem:[#allocation5 + $0x2b0] sm:$0xff]
    %v636 = vld [vmem:[#allocation5 + $0x2b8] sm:$0xff]
    %v637 = vld [vmem:[#allocation5 + $0x2c0] sm:$0xff]
    %v638 = vld [vmem:[#allocation5 + $0x2c8] sm:$0xff]
    %v639 = vld [vmem:[#allocation5 + $0x2d0] sm:$0xff]
    %v640 = vld [vmem:[#allocation5 + $0x2d8] sm:$0xff]
    %v641 = vld [vmem:[#allocation5 + $0x2e0] sm:$0xff]
    %v642 = vld [vmem:[#allocation5 + $0x2e8] sm:$0xff]
    %v643 = vld [vmem:[#allocation5 + $0x2f0] sm:$0xff]
    %v644 = vld [vmem:[#allocation5 + $0x2f8] sm:$0xff]
    %v645 = vld [vmem:[#allocation5 + $0x300] sm:$0xff]
    %v646 = vld [vmem:[#allocation5 + $0x308] sm:$0xff]
    %v647 = vld [vmem:[#allocation5 + $0x310] sm:$0xff]
    %v648 = vld [vmem:[#allocation5 + $0x318] sm:$0xff]
    %v649 = vld [vmem:[#allocation5 + $0x320] sm:$0xff]
    %v650 = vld [vmem:[#allocation5 + $0x328] sm:$0xff]
    %v651 = vld [vmem:[#allocation5 + $0x330] sm:$0xff]
    %v652 = vld [vmem:[#allocation5 + $0x338] sm:$0xff]
    %v653 = vld [vmem:[#allocation5 + $0x340] sm:$0xff]
    %v654 = vld [vmem:[#allocation5 + $0x348] sm:$0xff]
    %v655 = vld [vmem:[#allocation5 + $0x350] sm:$0xff]
    %v656 = vld [vmem:[#allocation5 + $0x358] sm:$0xff]
    %v657 = vld [vmem:[#allocation5 + $0x360] sm:$0xff]
    %v658 = vld [vmem:[#allocation5 + $0x368] sm:$0xff]
    %v659 = vld [vmem:[#allocation5 + $0x370] sm:$0xff]
    %v660 = vld [vmem:[#allocation5 + $0x378] sm:$0xff]
    %v661 = vld [vmem:[#allocation5 + $0x380] sm:$0xff]
    %v662 = vld [vmem:[#allocation5 + $0x388] sm:$0xff]
    %v663 = vld [vmem:[#allocation5 + $0x390] sm:$0xff]
    %v664 = vld [vmem:[#allocation5 + $0x398] sm:$0xff]
    %v665 = vld [vmem:[#allocation5 + $0x3a0] sm:$0xff]
    %v666 = vld [vmem:[#allocation5 + $0x3a8] sm:$0xff]
    %v667 = vld [vmem:[#allocation5 + $0x3b0] sm:$0xff]
    %v668 = vld [vmem:[#allocation5 + $0x3b8] sm:$0xff]
    %v669 = vld [vmem:[#allocation5 + $0x3c0] sm:$0xff]
    %v670 = vld [vmem:[#allocation5 + $0x3c8] sm:$0xff]
    %v671 = vld [vmem:[#allocation5 + $0x3d0] sm:$0xff]
    %v672 = vld [vmem:[#allocation5 + $0x3d8] sm:$0xff]
    %v673 = vld [vmem:[#allocation5 + $0x3e0] sm:$0xff]
    %v674 = vld [vmem:[#allocation5 + $0x3e8] sm:$0xff]
    %v675 = vld [vmem:[#allocation5 + $0x3f0] sm:$0xff]
    %v676 = vld [vmem:[#allocation5 + $0x3f8] sm:$0xff]
    %v677 = vld [vmem:[%s6] sm:$0xf]
    %v679 = vperm.slane %v677, 0
    %v680 = vperm.slane %v677, 1
    %v681 = vperm.slane %v677, 2
    %v682 = vperm.slane %v677, 3
    %v815 = vunpack.c.l.b16 %v549
    %v816 = vunpack.c.h.b16 %v549
    %v817 = vunpack.c.l.b16 %v550
    %v818 = vunpack.c.h.b16 %v550
    %v819 = vunpack.c.l.b16 %v551
    %v820 = vunpack.c.h.b16 %v551
    %v821 = vunpack.c.l.b16 %v552
    %v822 = vunpack.c.h.b16 %v552
    %v823 = vunpack.c.l.b16 %v553
    %v824 = vunpack.c.h.b16 %v553
    %v825 = vunpack.c.l.b16 %v554
    %v826 = vunpack.c.h.b16 %v554
    %v827 = vunpack.c.l.b16 %v555
    %v828 = vunpack.c.h.b16 %v555
    %v829 = vunpack.c.l.b16 %v556
    %v830 = vunpack.c.h.b16 %v556
    %v831 = vunpack.c.l.b16 %v557
    %v832 = vunpack.c.h.b16 %v557
    %v833 = vunpack.c.l.b16 %v558
    %v834 = vunpack.c.h.b16 %v558
    %v835 = vunpack.c.l.b16 %v559
    %v836 = vunpack.c.h.b16 %v559
    %v837 = vunpack.c.l.b16 %v560
    %v838 = vunpack.c.h.b16 %v560
    %v839 = vunpack.c.l.b16 %v561
    %v840 = vunpack.c.h.b16 %v561
    %v841 = vunpack.c.l.b16 %v562
    %v842 = vunpack.c.h.b16 %v562
    %v843 = vunpack.c.l.b16 %v563
    %v844 = vunpack.c.h.b16 %v563
    %v845 = vunpack.c.l.b16 %v564
    %v846 = vunpack.c.h.b16 %v564
    %v847 = vunpack.c.l.b16 %v565
    %v848 = vunpack.c.h.b16 %v565
    %v849 = vunpack.c.l.b16 %v566
    %v850 = vunpack.c.h.b16 %v566
    %v851 = vunpack.c.l.b16 %v567
    %v852 = vunpack.c.h.b16 %v567
    %v853 = vunpack.c.l.b16 %v568
    %v854 = vunpack.c.h.b16 %v568
    %v855 = vunpack.c.l.b16 %v569
    %v856 = vunpack.c.h.b16 %v569
    %v857 = vunpack.c.l.b16 %v570
    %v858 = vunpack.c.h.b16 %v570
    %v859 = vunpack.c.l.b16 %v571
    %v860 = vunpack.c.h.b16 %v571
    %v861 = vunpack.c.l.b16 %v572
    %v862 = vunpack.c.h.b16 %v572
    %v863 = vunpack.c.l.b16 %v573
    %v864 = vunpack.c.h.b16 %v573
    %v865 = vunpack.c.l.b16 %v574
    %v866 = vunpack.c.h.b16 %v574
    %v867 = vunpack.c.l.b16 %v575
    %v868 = vunpack.c.h.b16 %v575
    %v869 = vunpack.c.l.b16 %v576
    %v870 = vunpack.c.h.b16 %v576
    %v871 = vunpack.c.l.b16 %v577
    %v872 = vunpack.c.h.b16 %v577
    %v873 = vunpack.c.l.b16 %v578
    %v874 = vunpack.c.h.b16 %v578
    %v875 = vunpack.c.l.b16 %v579
    %v876 = vunpack.c.h.b16 %v579
    %v877 = vunpack.c.l.b16 %v580
    %v878 = vunpack.c.h.b16 %v580
    %v879 = vunpack.c.l.b16 %v581
    %v880 = vunpack.c.h.b16 %v581
    %v881 = vunpack.c.l.b16 %v582
    %v882 = vunpack.c.h.b16 %v582
    %v883 = vunpack.c.l.b16 %v583
    %v884 = vunpack.c.h.b16 %v583
    %v885 = vunpack.c.l.b16 %v584
    %v886 = vunpack.c.h.b16 %v584
    %v887 = vunpack.c.l.b16 %v585
    %v888 = vunpack.c.h.b16 %v585
    %v889 = vunpack.c.l.b16 %v586
    %v890 = vunpack.c.h.b16 %v586
    %v891 = vunpack.c.l.b16 %v587
    %v892 = vunpack.c.h.b16 %v587
    %v893 = vunpack.c.l.b16 %v588
    %v894 = vunpack.c.h.b16 %v588
    %v895 = vunpack.c.l.b16 %v589
    %v896 = vunpack.c.h.b16 %v589
    %v897 = vunpack.c.l.b16 %v590
    %v898 = vunpack.c.h.b16 %v590
    %v899 = vunpack.c.l.b16 %v591
    %v900 = vunpack.c.h.b16 %v591
    %v901 = vunpack.c.l.b16 %v592
    %v902 = vunpack.c.h.b16 %v592
    %v903 = vunpack.c.l.b16 %v593
    %v904 = vunpack.c.h.b16 %v593
    %v905 = vunpack.c.l.b16 %v594
    %v906 = vunpack.c.h.b16 %v594
    %v907 = vunpack.c.l.b16 %v595
    %v908 = vunpack.c.h.b16 %v595
    %v909 = vunpack.c.l.b16 %v596
    %v910 = vunpack.c.h.b16 %v596
    %v911 = vunpack.c.l.b16 %v597
    %v912 = vunpack.c.h.b16 %v597
    %v913 = vunpack.c.l.b16 %v598
    %v914 = vunpack.c.h.b16 %v598
    %v915 = vunpack.c.l.b16 %v599
    %v916 = vunpack.c.h.b16 %v599
    %v917 = vunpack.c.l.b16 %v600
    %v918 = vunpack.c.h.b16 %v600
    %v919 = vunpack.c.l.b16 %v601
    %v920 = vunpack.c.h.b16 %v601
    %v921 = vunpack.c.l.b16 %v602
    %v922 = vunpack.c.h.b16 %v602
    %v923 = vunpack.c.l.b16 %v603
    %v924 = vunpack.c.h.b16 %v603
    %v925 = vunpack.c.l.b16 %v604
    %v926 = vunpack.c.h.b16 %v604
    %v927 = vunpack.c.l.b16 %v605
    %v928 = vunpack.c.h.b16 %v605
    %v929 = vunpack.c.l.b16 %v606
    %v930 = vunpack.c.h.b16 %v606
    %v931 = vunpack.c.l.b16 %v607
    %v932 = vunpack.c.h.b16 %v607
    %v933 = vunpack.c.l.b16 %v608
    %v934 = vunpack.c.h.b16 %v608
    %v935 = vunpack.c.l.b16 %v609
    %v936 = vunpack.c.h.b16 %v609
    %v937 = vunpack.c.l.b16 %v610
    %v938 = vunpack.c.h.b16 %v610
    %v939 = vunpack.c.l.b16 %v611
    %v940 = vunpack.c.h.b16 %v611
    %v941 = vunpack.c.l.b16 %v612
    %v942 = vunpack.c.h.b16 %v612
    %v943 = vunpack.c.l.b16 %v613
    %v944 = vunpack.c.h.b16 %v613
    %v945 = vunpack.c.l.b16 %v614
    %v946 = vunpack.c.h.b16 %v614
    %v947 = vunpack.c.l.b16 %v615
    %v948 = vunpack.c.h.b16 %v615
    %v949 = vunpack.c.l.b16 %v616
    %v950 = vunpack.c.h.b16 %v616
    %v951 = vunpack.c.l.b16 %v617
    %v952 = vunpack.c.h.b16 %v617
    %v953 = vunpack.c.l.b16 %v618
    %v954 = vunpack.c.h.b16 %v618
    %v955 = vunpack.c.l.b16 %v619
    %v956 = vunpack.c.h.b16 %v619
    %v957 = vunpack.c.l.b16 %v620
    %v958 = vunpack.c.h.b16 %v620
    %v959 = vunpack.c.l.b16 %v621
    %v960 = vunpack.c.h.b16 %v621
    %v961 = vunpack.c.l.b16 %v622
    %v962 = vunpack.c.h.b16 %v622
    %v963 = vunpack.c.l.b16 %v623
    %v964 = vunpack.c.h.b16 %v623
    %v965 = vunpack.c.l.b16 %v624
    %v966 = vunpack.c.h.b16 %v624
    %v967 = vunpack.c.l.b16 %v625
    %v968 = vunpack.c.h.b16 %v625
    %v969 = vunpack.c.l.b16 %v626
    %v970 = vunpack.c.h.b16 %v626
    %v971 = vunpack.c.l.b16 %v627
    %v972 = vunpack.c.h.b16 %v627
    %v973 = vunpack.c.l.b16 %v628
    %v974 = vunpack.c.h.b16 %v628
    %v975 = vunpack.c.l.b16 %v629
    %v976 = vunpack.c.h.b16 %v629
    %v977 = vunpack.c.l.b16 %v630
    %v978 = vunpack.c.h.b16 %v630
    %v979 = vunpack.c.l.b16 %v631
    %v980 = vunpack.c.h.b16 %v631
    %v981 = vunpack.c.l.b16 %v632
    %v982 = vunpack.c.h.b16 %v632
    %v983 = vunpack.c.l.b16 %v633
    %v984 = vunpack.c.h.b16 %v633
    %v985 = vunpack.c.l.b16 %v634
    %v986 = vunpack.c.h.b16 %v634
    %v987 = vunpack.c.l.b16 %v635
    %v988 = vunpack.c.h.b16 %v635
    %v989 = vunpack.c.l.b16 %v636
    %v990 = vunpack.c.h.b16 %v636
    %v991 = vunpack.c.l.b16 %v637
    %v992 = vunpack.c.h.b16 %v637
    %v993 = vunpack.c.l.b16 %v638
    %v994 = vunpack.c.h.b16 %v638
    %v995 = vunpack.c.l.b16 %v639
    %v996 = vunpack.c.h.b16 %v639
    %v997 = vunpack.c.l.b16 %v640
    %v998 = vunpack.c.h.b16 %v640
    %v999 = vunpack.c.l.b16 %v641
    %v1000 = vunpack.c.h.b16 %v641
    %v1001 = vunpack.c.l.b16 %v642
    %v1002 = vunpack.c.h.b16 %v642
    %v1003 = vunpack.c.l.b16 %v643
    %v1004 = vunpack.c.h.b16 %v643
    %v1005 = vunpack.c.l.b16 %v644
    %v1006 = vunpack.c.h.b16 %v644
    %v1007 = vunpack.c.l.b16 %v645
    %v1008 = vunpack.c.h.b16 %v645
    %v1009 = vunpack.c.l.b16 %v646
    %v1010 = vunpack.c.h.b16 %v646
    %v1011 = vunpack.c.l.b16 %v647
    %v1012 = vunpack.c.h.b16 %v647
    %v1013 = vunpack.c.l.b16 %v648
    %v1014 = vunpack.c.h.b16 %v648
    %v1015 = vunpack.c.l.b16 %v649
    %v1016 = vunpack.c.h.b16 %v649
    %v1017 = vunpack.c.l.b16 %v650
    %v1018 = vunpack.c.h.b16 %v650
    %v1019 = vunpack.c.l.b16 %v651
    %v1020 = vunpack.c.h.b16 %v651
    %v1021 = vunpack.c.l.b16 %v652
    %v1022 = vunpack.c.h.b16 %v652
    %v1023 = vunpack.c.l.b16 %v653
    %v1024 = vunpack.c.h.b16 %v653
    %v1025 = vunpack.c.l.b16 %v654
    %v1026 = vunpack.c.h.b16 %v654
    %v1027 = vunpack.c.l.b16 %v655
    %v1028 = vunpack.c.h.b16 %v655
    %v1029 = vunpack.c.l.b16 %v656
    %v1030 = vunpack.c.h.b16 %v656
    %v1031 = vunpack.c.l.b16 %v657
    %v1032 = vunpack.c.h.b16 %v657
    %v1033 = vunpack.c.l.b16 %v658
    %v1034 = vunpack.c.h.b16 %v658
    %v1035 = vunpack.c.l.b16 %v659
    %v1036 = vunpack.c.h.b16 %v659
    %v1037 = vunpack.c.l.b16 %v660
    %v1038 = vunpack.c.h.b16 %v660
    %v1039 = vunpack.c.l.b16 %v661
    %v1040 = vunpack.c.h.b16 %v661
    %v1041 = vunpack.c.l.b16 %v662
    %v1042 = vunpack.c.h.b16 %v662
    %v1043 = vunpack.c.l.b16 %v663
    %v1044 = vunpack.c.h.b16 %v663
    %v1045 = vunpack.c.l.b16 %v664
    %v1046 = vunpack.c.h.b16 %v664
    %v1047 = vunpack.c.l.b16 %v665
    %v1048 = vunpack.c.h.b16 %v665
    %v1049 = vunpack.c.l.b16 %v666
    %v1050 = vunpack.c.h.b16 %v666
    %v1051 = vunpack.c.l.b16 %v667
    %v1052 = vunpack.c.h.b16 %v667
    %v1053 = vunpack.c.l.b16 %v668
    %v1054 = vunpack.c.h.b16 %v668
    %v1055 = vunpack.c.l.b16 %v669
    %v1056 = vunpack.c.h.b16 %v669
    %v1057 = vunpack.c.l.b16 %v670
    %v1058 = vunpack.c.h.b16 %v670
    %v1059 = vunpack.c.l.b16 %v671
    %v1060 = vunpack.c.h.b16 %v671
    %v1061 = vunpack.c.l.b16 %v672
    %v1062 = vunpack.c.h.b16 %v672
    %v1063 = vunpack.c.l.b16 %v673
    %v1064 = vunpack.c.h.b16 %v673
    %v1065 = vunpack.c.l.b16 %v674
    %v1066 = vunpack.c.h.b16 %v674
    %v1067 = vunpack.c.l.b16 %v675
    %v1068 = vunpack.c.h.b16 %v675
    %v1069 = vunpack.c.l.b16 %v676
    %v1070 = vunpack.c.h.b16 %v676
    %v1071 = vpack.c.b16 %v819, %v815
    %v1072 = vpack.c.b16 %v820, %v816
    %v1073 = vpack.c.b16 %v821, %v817
    %v1074 = vpack.c.b16 %v822, %v818
    %v1075 = vpack.c.b16 %v827, %v823
    %v1076 = vpack.c.b16 %v828, %v824
    %v1077 = vpack.c.b16 %v829, %v825
    %v1078 = vpack.c.b16 %v830, %v826
    %v1079 = vpack.c.b16 %v835, %v831
    %v1080 = vpack.c.b16 %v836, %v832
    %v1081 = vpack.c.b16 %v837, %v833
    %v1082 = vpack.c.b16 %v838, %v834
    %v1083 = vpack.c.b16 %v843, %v839
    %v1084 = vpack.c.b16 %v844, %v840
    %v1085 = vpack.c.b16 %v845, %v841
    %v1086 = vpack.c.b16 %v846, %v842
    %v1087 = vpack.c.b16 %v851, %v847
    %v1088 = vpack.c.b16 %v852, %v848
    %v1089 = vpack.c.b16 %v853, %v849
    %v1090 = vpack.c.b16 %v854, %v850
    %v1091 = vpack.c.b16 %v859, %v855
    %v1092 = vpack.c.b16 %v860, %v856
    %v1093 = vpack.c.b16 %v861, %v857
    %v1094 = vpack.c.b16 %v862, %v858
    %v1095 = vpack.c.b16 %v867, %v863
    %v1096 = vpack.c.b16 %v868, %v864
    %v1097 = vpack.c.b16 %v869, %v865
    %v1098 = vpack.c.b16 %v870, %v866
    %v1099 = vpack.c.b16 %v875, %v871
    %v1100 = vpack.c.b16 %v876, %v872
    %v1101 = vpack.c.b16 %v877, %v873
    %v1102 = vpack.c.b16 %v878, %v874
    %v1103 = vpack.c.b16 %v883, %v879
    %v1104 = vpack.c.b16 %v884, %v880
    %v1105 = vpack.c.b16 %v885, %v881
    %v1106 = vpack.c.b16 %v886, %v882
    %v1107 = vpack.c.b16 %v891, %v887
    %v1108 = vpack.c.b16 %v892, %v888
    %v1109 = vpack.c.b16 %v893, %v889
    %v1110 = vpack.c.b16 %v894, %v890
    %v1111 = vpack.c.b16 %v899, %v895
    %v1112 = vpack.c.b16 %v900, %v896
    %v1113 = vpack.c.b16 %v901, %v897
    %v1114 = vpack.c.b16 %v902, %v898
    %v1115 = vpack.c.b16 %v907, %v903
    %v1116 = vpack.c.b16 %v908, %v904
    %v1117 = vpack.c.b16 %v909, %v905
    %v1118 = vpack.c.b16 %v910, %v906
    %v1119 = vpack.c.b16 %v915, %v911
    %v1120 = vpack.c.b16 %v916, %v912
    %v1121 = vpack.c.b16 %v917, %v913
    %v1122 = vpack.c.b16 %v918, %v914
    %v1123 = vpack.c.b16 %v923, %v919
    %v1124 = vpack.c.b16 %v924, %v920
    %v1125 = vpack.c.b16 %v925, %v921
    %v1126 = vpack.c.b16 %v926, %v922
    %v1127 = vpack.c.b16 %v931, %v927
    %v1128 = vpack.c.b16 %v932, %v928
    %v1129 = vpack.c.b16 %v933, %v929
    %v1130 = vpack.c.b16 %v934, %v930
    %v1131 = vpack.c.b16 %v939, %v935
    %v1132 = vpack.c.b16 %v940, %v936
    %v1133 = vpack.c.b16 %v941, %v937
    %v1134 = vpack.c.b16 %v942, %v938
    %v1135 = vpack.c.b16 %v947, %v943
    %v1136 = vpack.c.b16 %v948, %v944
    %v1137 = vpack.c.b16 %v949, %v945
    %v1138 = vpack.c.b16 %v950, %v946
    %v1139 = vpack.c.b16 %v955, %v951
    %v1140 = vpack.c.b16 %v956, %v952
    %v1141 = vpack.c.b16 %v957, %v953
    %v1142 = vpack.c.b16 %v958, %v954
    %v1143 = vpack.c.b16 %v963, %v959
    %v1144 = vpack.c.b16 %v964, %v960
    %v1145 = vpack.c.b16 %v965, %v961
    %v1146 = vpack.c.b16 %v966, %v962
    %v1147 = vpack.c.b16 %v971, %v967
    %v1148 = vpack.c.b16 %v972, %v968
    %v1149 = vpack.c.b16 %v973, %v969
    %v1150 = vpack.c.b16 %v974, %v970
    %v1151 = vpack.c.b16 %v979, %v975
    %v1152 = vpack.c.b16 %v980, %v976
    %v1153 = vpack.c.b16 %v981, %v977
    %v1154 = vpack.c.b16 %v982, %v978
    %v1155 = vpack.c.b16 %v987, %v983
    %v1156 = vpack.c.b16 %v988, %v984
    %v1157 = vpack.c.b16 %v989, %v985
    %v1158 = vpack.c.b16 %v990, %v986
    %v1159 = vpack.c.b16 %v995, %v991
    %v1160 = vpack.c.b16 %v996, %v992
    %v1161 = vpack.c.b16 %v997, %v993
    %v1162 = vpack.c.b16 %v998, %v994
    %v1163 = vpack.c.b16 %v1003, %v999
    %v1164 = vpack.c.b16 %v1004, %v1000
    %v1165 = vpack.c.b16 %v1005, %v1001
    %v1166 = vpack.c.b16 %v1006, %v1002
    %v1167 = vpack.c.b16 %v1011, %v1007
    %v1168 = vpack.c.b16 %v1012, %v1008
    %v1169 = vpack.c.b16 %v1013, %v1009
    %v1170 = vpack.c.b16 %v1014, %v1010
    %v1171 = vpack.c.b16 %v1019, %v1015
    %v1172 = vpack.c.b16 %v1020, %v1016
    %v1173 = vpack.c.b16 %v1021, %v1017
    %v1174 = vpack.c.b16 %v1022, %v1018
    %v1175 = vpack.c.b16 %v1027, %v1023
    %v1176 = vpack.c.b16 %v1028, %v1024
    %v1177 = vpack.c.b16 %v1029, %v1025
    %v1178 = vpack.c.b16 %v1030, %v1026
    %v1179 = vpack.c.b16 %v1035, %v1031
    %v1180 = vpack.c.b16 %v1036, %v1032
    %v1181 = vpack.c.b16 %v1037, %v1033
    %v1182 = vpack.c.b16 %v1038, %v1034
    %v1183 = vpack.c.b16 %v1043, %v1039
    %v1184 = vpack.c.b16 %v1044, %v1040
    %v1185 = vpack.c.b16 %v1045, %v1041
    %v1186 = vpack.c.b16 %v1046, %v1042
    %v1187 = vpack.c.b16 %v1051, %v1047
    %v1188 = vpack.c.b16 %v1052, %v1048
    %v1189 = vpack.c.b16 %v1053, %v1049
    %v1190 = vpack.c.b16 %v1054, %v1050
    %v1191 = vpack.c.b16 %v1059, %v1055
    %v1192 = vpack.c.b16 %v1060, %v1056
    %v1193 = vpack.c.b16 %v1061, %v1057
    %v1194 = vpack.c.b16 %v1062, %v1058
    %v1195 = vpack.c.b16 %v1067, %v1063
    %v1196 = vpack.c.b16 %v1068, %v1064
    %v1197 = vpack.c.b16 %v1069, %v1065
    %v1198 = vpack.c.b16 %v1070, %v1066
    %1327 = vmatpush.bf16.msra.mxu0 %v1099
    %1328 = vmatpush.bf16.msra.mxu0 %v1095
    %1329 = vmatpush.bf16.msra.mxu0 %v1091
    %1330 = vmatpush.bf16.msra.mxu0 %v1087
    %1331 = vmatpush.bf16.msra.mxu0 %v1083
    %1332 = vmatpush.bf16.msra.mxu0 %v1079
    %1333 = vmatpush.bf16.msra.mxu0 %v1075
    %1334 = vmatpush.bf16.msra.mxu0 %v1071
    %1335 = vmatmul.bf16.gmra.mxu0 %v545
    %v1336 = vpop.f32.mrf.mxu0
    %v1337 = vadd.f32 %v679, %v1336
    %v1338 = vpop.f32.mrf.mxu0
    %1339 = vdwg.mxu0
    %1340 = vmatpush.bf16.msra.mxu0 %v1131
    %1341 = vmatpush.bf16.msra.mxu0 %v1127
    %1342 = vmatpush.bf16.msra.mxu0 %v1123
    %1343 = vmatpush.bf16.msra.mxu0 %v1119
    %1344 = vmatpush.bf16.msra.mxu0 %v1115
    %1345 = vmatpush.bf16.msra.mxu0 %v1111
    %1346 = vmatpush.bf16.msra.mxu0 %v1107
    %1347 = vmatpush.bf16.msra.mxu0 %v1103
    %1348 = vmatmul.bf16.gmra.mxu0 %v546
    %v1349 = vpop.f32.mrf.mxu0
    %v1350 = vadd.f32 %v1337, %v1349
    %v1351 = vpop.f32.mrf.mxu0
    %1352 = vdwg.mxu0
    %1353 = vmatpush.bf16.msra.mxu0 %v1163
    %1354 = vmatpush.bf16.msra.mxu0 %v1159
    %1355 = vmatpush.bf16.msra.mxu0 %v1155
    %1356 = vmatpush.bf16.msra.mxu0 %v1151
    %1357 = vmatpush.bf16.msra.mxu0 %v1147
    %1358 = vmatpush.bf16.msra.mxu0 %v1143
    %1359 = vmatpush.bf16.msra.mxu0 %v1139
    %1360 = vmatpush.bf16.msra.mxu0 %v1135
    %1361 = vmatmul.bf16.gmra.mxu0 %v547
    %v1362 = vpop.f32.mrf.mxu0
    %v1363 = vadd.f32 %v1350, %v1362
    %v1364 = vpop.f32.mrf.mxu0
    %1365 = vdwg.mxu0
    %1366 = vmatpush.bf16.msra.mxu0 %v1195
    %1367 = vmatpush.bf16.msra.mxu0 %v1191
    %1368 = vmatpush.bf16.msra.mxu0 %v1187
    %1369 = vmatpush.bf16.msra.mxu0 %v1183
    %1370 = vmatpush.bf16.msra.mxu0 %v1179
    %1371 = vmatpush.bf16.msra.mxu0 %v1175
    %1372 = vmatpush.bf16.msra.mxu0 %v1171
    %1373 = vmatpush.bf16.msra.mxu0 %v1167
    %1374 = vmatmul.bf16.gmra.mxu0 %v548
    %v1375 = vpop.f32.mrf.mxu0
    %v1376 = vadd.f32 %v1363, %v1375
    %v1377 = vpop.f32.mrf.mxu0
    %1378 = vdwg.mxu0
    %1379 = vmatpush.bf16.msra.mxu0 %v1100
    %1380 = vmatpush.bf16.msra.mxu0 %v1096
    %1381 = vmatpush.bf16.msra.mxu0 %v1092
    %1382 = vmatpush.bf16.msra.mxu0 %v1088
    %1383 = vmatpush.bf16.msra.mxu0 %v1084
    %1384 = vmatpush.bf16.msra.mxu0 %v1080
    %1385 = vmatpush.bf16.msra.mxu0 %v1076
    %1386 = vmatpush.bf16.msra.mxu0 %v1072
    %1387 = vmatmul.bf16.gmra.mxu0 %v545
    %v1388 = vpop.f32.mrf.mxu0
    %v1389 = vadd.f32 %v680, %v1388
    %v1390 = vpop.f32.mrf.mxu0
    %1391 = vdwg.mxu0
    %1392 = vmatpush.bf16.msra.mxu0 %v1132
    %1393 = vmatpush.bf16.msra.mxu0 %v1128
    %1394 = vmatpush.bf16.msra.mxu0 %v1124
    %1395 = vmatpush.bf16.msra.mxu0 %v1120
    %1396 = vmatpush.bf16.msra.mxu0 %v1116
    %1397 = vmatpush.bf16.msra.mxu0 %v1112
    %1398 = vmatpush.bf16.msra.mxu0 %v1108
    %1399 = vmatpush.bf16.msra.mxu0 %v1104
    %1400 = vmatmul.bf16.gmra.mxu0 %v546
    %v1401 = vpop.f32.mrf.mxu0
    %v1402 = vadd.f32 %v1389, %v1401
    %v1403 = vpop.f32.mrf.mxu0
    %1404 = vdwg.mxu0
    %1405 = vmatpush.bf16.msra.mxu0 %v1164
    %1406 = vmatpush.bf16.msra.mxu0 %v1160
    %1407 = vmatpush.bf16.msra.mxu0 %v1156
    %1408 = vmatpush.bf16.msra.mxu0 %v1152
    %1409 = vmatpush.bf16.msra.mxu0 %v1148
    %1410 = vmatpush.bf16.msra.mxu0 %v1144
    %1411 = vmatpush.bf16.msra.mxu0 %v1140
    %1412 = vmatpush.bf16.msra.mxu0 %v1136
    %1413 = vmatmul.bf16.gmra.mxu0 %v547
    %v1414 = vpop.f32.mrf.mxu0
    %v1415 = vadd.f32 %v1402, %v1414
    %v1416 = vpop.f32.mrf.mxu0
    %1417 = vdwg.mxu0
    %1418 = vmatpush.bf16.msra.mxu0 %v1196
    %1419 = vmatpush.bf16.msra.mxu0 %v1192
    %1420 = vmatpush.bf16.msra.mxu0 %v1188
    %1421 = vmatpush.bf16.msra.mxu0 %v1184
    %1422 = vmatpush.bf16.msra.mxu0 %v1180
    %1423 = vmatpush.bf16.msra.mxu0 %v1176
    %1424 = vmatpush.bf16.msra.mxu0 %v1172
    %1425 = vmatpush.bf16.msra.mxu0 %v1168
    %1426 = vmatmul.bf16.gmra.mxu0 %v548
    %v1427 = vpop.f32.mrf.mxu0
    %v1428 = vadd.f32 %v1415, %v1427
    %v1429 = vpop.f32.mrf.mxu0
    %1430 = vdwg.mxu0
    %1431 = vmatpush.bf16.msra.mxu0 %v1101
    %1432 = vmatpush.bf16.msra.mxu0 %v1097
    %1433 = vmatpush.bf16.msra.mxu0 %v1093
    %1434 = vmatpush.bf16.msra.mxu0 %v1089
    %1435 = vmatpush.bf16.msra.mxu0 %v1085
    %1436 = vmatpush.bf16.msra.mxu0 %v1081
    %1437 = vmatpush.bf16.msra.mxu0 %v1077
    %1438 = vmatpush.bf16.msra.mxu0 %v1073
    %1439 = vmatmul.bf16.gmra.mxu0 %v545
    %v1440 = vpop.f32.mrf.mxu0
    %v1441 = vadd.f32 %v681, %v1440
    %v1442 = vpop.f32.mrf.mxu0
    %1443 = vdwg.mxu0
    %1444 = vmatpush.bf16.msra.mxu0 %v1133
    %1445 = vmatpush.bf16.msra.mxu0 %v1129
    %1446 = vmatpush.bf16.msra.mxu0 %v1125
    %1447 = vmatpush.bf16.msra.mxu0 %v1121
    %1448 = vmatpush.bf16.msra.mxu0 %v1117
    %1449 = vmatpush.bf16.msra.mxu0 %v1113
    %1450 = vmatpush.bf16.msra.mxu0 %v1109
    %1451 = vmatpush.bf16.msra.mxu0 %v1105
    %1452 = vmatmul.bf16.gmra.mxu0 %v546
    %v1453 = vpop.f32.mrf.mxu0
    %v1454 = vadd.f32 %v1441, %v1453
    %v1455 = vpop.f32.mrf.mxu0
    %1456 = vdwg.mxu0
    %1457 = vmatpush.bf16.msra.mxu0 %v1165
    %1458 = vmatpush.bf16.msra.mxu0 %v1161
    %1459 = vmatpush.bf16.msra.mxu0 %v1157
    %1460 = vmatpush.bf16.msra.mxu0 %v1153
    %1461 = vmatpush.bf16.msra.mxu0 %v1149
    %1462 = vmatpush.bf16.msra.mxu0 %v1145
    %1463 = vmatpush.bf16.msra.mxu0 %v1141
    %1464 = vmatpush.bf16.msra.mxu0 %v1137
    %1465 = vmatmul.bf16.gmra.mxu0 %v547
    %v1466 = vpop.f32.mrf.mxu0
    %v1467 = vadd.f32 %v1454, %v1466
    %v1468 = vpop.f32.mrf.mxu0
    %1469 = vdwg.mxu0
    %1470 = vmatpush.bf16.msra.mxu0 %v1197
    %1471 = vmatpush.bf16.msra.mxu0 %v1193
    %1472 = vmatpush.bf16.msra.mxu0 %v1189
    %1473 = vmatpush.bf16.msra.mxu0 %v1185
    %1474 = vmatpush.bf16.msra.mxu0 %v1181
    %1475 = vmatpush.bf16.msra.mxu0 %v1177
    %1476 = vmatpush.bf16.msra.mxu0 %v1173
    %1477 = vmatpush.bf16.msra.mxu0 %v1169
    %1478 = vmatmul.bf16.gmra.mxu0 %v548
    %v1479 = vpop.f32.mrf.mxu0
    %v1480 = vadd.f32 %v1467, %v1479
    %v1481 = vpop.f32.mrf.mxu0
    %1482 = vdwg.mxu0
    %1483 = vmatpush.bf16.msra.mxu0 %v1102
    %1484 = vmatpush.bf16.msra.mxu0 %v1098
    %1485 = vmatpush.bf16.msra.mxu0 %v1094
    %1486 = vmatpush.bf16.msra.mxu0 %v1090
    %1487 = vmatpush.bf16.msra.mxu0 %v1086
    %1488 = vmatpush.bf16.msra.mxu0 %v1082
    %1489 = vmatpush.bf16.msra.mxu0 %v1078
    %1490 = vmatpush.bf16.msra.mxu0 %v1074
    %1491 = vmatmul.bf16.gmra.mxu0 %v545
    %v1492 = vpop.f32.mrf.mxu0
    %v1493 = vadd.f32 %v682, %v1492
    %v1494 = vpop.f32.mrf.mxu0
    %1495 = vdwg.mxu0
    %1496 = vmatpush.bf16.msra.mxu0 %v1134
    %1497 = vmatpush.bf16.msra.mxu0 %v1130
    %1498 = vmatpush.bf16.msra.mxu0 %v1126
    %1499 = vmatpush.bf16.msra.mxu0 %v1122
    %1500 = vmatpush.bf16.msra.mxu0 %v1118
    %1501 = vmatpush.bf16.msra.mxu0 %v1114
    %1502 = vmatpush.bf16.msra.mxu0 %v1110
    %1503 = vmatpush.bf16.msra.mxu0 %v1106
    %1504 = vmatmul.bf16.gmra.mxu0 %v546
    %v1505 = vpop.f32.mrf.mxu0
    %v1506 = vadd.f32 %v1493, %v1505
    %v1507 = vpop.f32.mrf.mxu0
    %1508 = vdwg.mxu0
    %1509 = vmatpush.bf16.msra.mxu0 %v1166
    %1510 = vmatpush.bf16.msra.mxu0 %v1162
    %1511 = vmatpush.bf16.msra.mxu0 %v1158
    %1512 = vmatpush.bf16.msra.mxu0 %v1154
    %1513 = vmatpush.bf16.msra.mxu0 %v1150
    %1514 = vmatpush.bf16.msra.mxu0 %v1146
    %1515 = vmatpush.bf16.msra.mxu0 %v1142
    %1516 = vmatpush.bf16.msra.mxu0 %v1138
    %1517 = vmatmul.bf16.gmra.mxu0 %v547
    %v1518 = vpop.f32.mrf.mxu0
    %v1519 = vadd.f32 %v1506, %v1518
    %v1520 = vpop.f32.mrf.mxu0
    %1521 = vdwg.mxu0
    %1522 = vmatpush.bf16.msra.mxu0 %v1198
    %1523 = vmatpush.bf16.msra.mxu0 %v1194
    %1524 = vmatpush.bf16.msra.mxu0 %v1190
    %1525 = vmatpush.bf16.msra.mxu0 %v1186
    %1526 = vmatpush.bf16.msra.mxu0 %v1182
    %1527 = vmatpush.bf16.msra.mxu0 %v1178
    %1528 = vmatpush.bf16.msra.mxu0 %v1174
    %1529 = vmatpush.bf16.msra.mxu0 %v1170
    %1530 = vmatmul.bf16.gmra.mxu0 %v548
    %v1531 = vpop.f32.mrf.mxu0
    %v1532 = vadd.f32 %v1519, %v1531
    %v1533 = vpop.f32.mrf.mxu0
    %1534 = vdwg.mxu0
    %v1535 = vpack.c.bf16 %v1428, %v1376
    %v1536 = vpack.c.bf16 %v1532, %v1480
    %v1537 = vxor.u32 %v1535, 2147516416
    %v1538 = vxor.u32 %v1536, 2147516416
    %v1539 = vunpack.c.l.bf16 %v1537
    %v1540 = vunpack.c.h.bf16 %v1537
    %v1541 = vunpack.c.l.bf16 %v1538
    %v1542 = vunpack.c.h.bf16 %v1538
    %v1543 = vmul.f32 %v1539, 1.442695
    %v1544 = vpow.pop %v1543
    %v1545 = vmul.f32 %v1540, 1.442695
    %v1546 = vpow.pop %v1545
    %v1547 = vmul.f32 %v1541, 1.442695
    %v1548 = vpow.pop %v1547
    %v1549 = vmul.f32 %v1542, 1.442695
    %v1550 = vpow.pop %v1549
    %v1551 = vpack.c.bf16 %v1546, %v1544
    %v1552 = vpack.c.bf16 %v1550, %v1548
    %v1553 = vunpack.c.l.bf16 %v1551
    %v1554 = vunpack.c.h.bf16 %v1551
    %v1555 = vunpack.c.l.bf16 %v1552
    %v1556 = vunpack.c.h.bf16 %v1552
    %v1557 = vadd.f32 %v1553, 1.0
    %v1558 = vadd.f32 %v1554, 1.0
    %v1559 = vadd.f32 %v1555, 1.0
    %v1560 = vadd.f32 %v1556, 1.0
    %v1561 = vpack.c.bf16 %v1558, %v1557
    %v1562 = vpack.c.bf16 %v1560, %v1559
    %v1563 = vunpack.c.h.bf16 %v1561
    %v1564 = vunpack.c.l.bf16 %v1561
    %v1565 = vrcp.pop %v1563
    %v1566 = vmul.f32 %v517, %v1565
    %v1567 = vrcp.pop %v1564
    %v1568 = vmul.f32 %v518, %v1567
    %v1569 = vpack.c.bf16 %v1566, %v1568
    %v1570 = vunpack.c.h.bf16 %v1562
    %v1571 = vunpack.c.l.bf16 %v1562
    %v1572 = vrcp.pop %v1570
    %v1573 = vmul.f32 %v517, %v1572
    %v1574 = vrcp.pop %v1571
    %v1575 = vmul.f32 %v518, %v1574
    %v1576 = vpack.c.bf16 %v1573, %v1575
    %v1577 = vunpack.c.l.bf16 %v1535
    %v1578 = vunpack.c.h.bf16 %v1535
    %v1579 = vunpack.c.l.bf16 %v1536
    %v1580 = vunpack.c.h.bf16 %v1536
    %v1581 = vunpack.c.l.bf16 %v1569
    %v1582 = vunpack.c.h.bf16 %v1569
    %v1583 = vunpack.c.l.bf16 %v1576
    %v1584 = vunpack.c.h.bf16 %v1576
    %v1585 = vmul.f32 %v1577, %v1581
    %v1586 = vmul.f32 %v1578, %v1582
    %v1587 = vmul.f32 %v1579, %v1583
    %v1588 = vmul.f32 %v1580, %v1584
    %v1589 = vpack.c.bf16 %v1585, %v1585
    %v1590 = vpack.c.bf16 %v1586, %v1586
    %v1591 = vpack.c.bf16 %v1587, %v1587
    %v1592 = vpack.c.bf16 %v1588, %v1588
    %v1593 = vunpack.c.l.bf16 %v1589
    %v1594 = vunpack.c.l.bf16 %v1590
    %v1595 = vunpack.c.l.bf16 %v1591
    %v1596 = vunpack.c.l.bf16 %v1592
    %1597 = vst [vmem:[#allocation7] sm:$0xff] %v1593
    %1598 = vst [vmem:[#allocation7 + $0x8] sm:$0xff] %v1594
    %1599 = vst [vmem:[#allocation7 + $0x10] sm:$0xff] %v1595
    %1600 = vst [vmem:[#allocation7 + $0x18] sm:$0xff] %v1596
    // Predicated region
    $region38: #{tpu_custom_call.1} parent=1 // pred_check
      _
    $region39: #{tpu_custom_call.1} parent=1 // pred_check_branch
      %1602 = sbr.rel (0) target = $region41
    $region40: #{tpu_custom_call.1} parent=1 // pred_region
      %1604 = vsyncadd [#allocation4], 0
      %s1606 = sshll.u32 [#allocation7], 4
      %s1607 = int_to_ptr.vmem [resolvable:$true] %s1606
      %s1608 = sshll.u32 %s7, 4
      %s1609 = int_to_ptr.hbm [resolvable:$true] %s1608
      %1611 = dma.vmem_to_hbm [thread:$0]  %s1607, 512, %s1609, [#allocation4]
    $region41: #{tpu_custom_call.1} parent=1 // pred_fallthru
      _
    // Predicated region
    $region42: #{tpu_custom_call.1} parent=1 // pred_check
      _
    $region43: #{tpu_custom_call.1} parent=1 // pred_check_branch
      %1613 = sbr.rel (0) target = $region45
    $region44: #{tpu_custom_call.1} parent=1 // pred_region
      %1615 = dma.done [#allocation4], 512
    $region45: #{tpu_custom_call.1} parent=1 // pred_fallthru
      _
    %1616 = vsyncpa [#allocation3], 1
    %1617 = vsyncpa [#allocation6], 1
    %1618 = vsyncpa [#allocation4], 1

</llo_original>
